<compile_context>
chip_gen: v6e
topology: v6e:2x2x1
jax: 0.10.0
libtpu: 0.0.40
codegen_flags: <defaults>
</compile_context>

<pallas_src>
import jax
import jax.numpy as jnp
from jax import lax
from jax.experimental import pallas as pl
from jax.experimental.pallas import tpu as pltpu


def _round_up(n, m):
    return ((n + m - 1) // m) * m


def simple_nn_kernel(x_ref, w1_ref, b1_ref, w2t_ref, b2_ref, o_ref):
    """One batch tile: h = relu(x @ W1 + b1); out = (W2^T @ h^T) + b2, stored (2, TB)."""
    x = x_ref[...]                                                     # (TB, 10)
    h = jnp.dot(x, w1_ref[...], preferred_element_type=jnp.float32)    # (TB, 50) f32 acc
    h = jnp.maximum(h + b1_ref[...], 0.0)                              # bias + ReLU (f32)
    # Lane-dense output: y_t[n, b] = sum_k w2t[n, k] * h[b, k]  -> (2, TB).
    y_t = lax.dot_general(
        w2t_ref[...], h.astype(w2t_ref.dtype),
        dimension_numbers=(((1,), (1,)), ((), ())),
        preferred_element_type=jnp.float32)
    o_ref[...] = (y_t + b2_ref[...]).astype(o_ref.dtype)               # (2, TB)


def simple_nn_forward(x, w1, b1, w2, b2, *, block_b=512, compute_dtype=None):
    """x: (B, 10); w1: (10, 50); b1: (50,); w2: (50, 2); b2: (2,). Returns (B, 2) f32.

    block_b: batch rows per grid step (rounded to a multiple of 128; >=512 reaches
    ~85% of HBM roofline per the measured tile sweep — this kernel is mem-bound).
    compute_dtype: optionally jnp.bfloat16 for x/W1/W2 (f32 accumulation kept).
    """
    B, K = x.shape          # K = 10
    H = w1.shape[1]         # 50
    N = w2.shape[1]         # 2

    if compute_dtype is not None:
        x = x.astype(compute_dtype)
        w1 = w1.astype(compute_dtype)
        w2 = w2.astype(compute_dtype)

    # Batch tile must be a multiple of 128 so the transposed (N, TB) output block
    # is lane-dense (unmasked vector stores); also keeps the sublane (8) rule.
    tb = _round_up(min(block_b, B), 128)
    b_pad = _round_up(B, tb)
    if b_pad != B:
        x = jnp.pad(x, ((0, b_pad - B), (0, 0)))   # padded rows are sliced off below

    b1_row = b1.reshape(1, H).astype(jnp.float32)   # broadcast over batch rows
    b2_col = b2.reshape(N, 1).astype(jnp.float32)   # broadcast over batch lanes
    w2t = w2.T                                      # (N, H) = (2, 50)

    out_t = pl.pallas_call(
        simple_nn_kernel,
        out_shape=jax.ShapeDtypeStruct((N, b_pad), jnp.float32),
        grid_spec=pl.GridSpec(
            grid=(b_pad // tb,),
            in_specs=[
                # Streaming input: one batch tile per grid step (double-buffered).
                # If DMA is still exposed (xprof wall >> compute), add
                # pipeline_mode=pl.Buffered(3) to this spec.
                pl.BlockSpec((tb, K), lambda i: (i, 0)),
                # Weights / biases: constant block index -> DMA'd once,
                # VMEM-resident across all grid steps.
                pl.BlockSpec((K, H), lambda i: (0, 0)),
                pl.BlockSpec((1, H), lambda i: (0, 0)),
                pl.BlockSpec((N, H), lambda i: (0, 0)),
                pl.BlockSpec((N, 1), lambda i: (0, 0)),
            ],
            out_specs=pl.BlockSpec((N, tb), lambda i: (0, i)),
        ),
        compiler_params=pltpu.CompilerParams(
            # Batch tiles are independent -> lets v7x split the grid over both TCs.
            dimension_semantics=("parallel",),
            # Lift v5e's 16 MiB default scoped VMEM limit; default on v6e/v7x.
            vmem_limit_bytes=32 * 1024 * 1024,
        ),
    )(x, w1, b1_row, w2t, b2_col)

    # Un-pad and un-transpose the tiny (N, B) result back to PyTorch's (B, N).
    return out_t[:, :B].T


def init_params(key):
    """Deterministic init matching PyTorch nn.Linear shapes.

    PyTorch stores weight as (out_features, in_features); build in that
    convention and transpose to (in, out) for the kernel's x @ W layout.
    """
    k1, k2, k3, k4 = jax.random.split(key, 4)
    bound1 = 1.0 / jnp.sqrt(10.0)
    w1_pt = jax.random.uniform(k1, (50, 10), jnp.float32, -bound1, bound1)
    b1 = jax.random.uniform(k2, (50,), jnp.float32, -bound1, bound1)
    bound2 = 1.0 / jnp.sqrt(50.0)
    w2_pt = jax.random.uniform(k3, (2, 50), jnp.float32, -bound2, bound2)
    b2 = jax.random.uniform(k4, (2,), jnp.float32, -bound2, bound2)
    return w1_pt.T, b1, w2_pt.T, b2


if __name__ == "__main__":
    key = jax.random.PRNGKey(0)
    kx, kp = jax.random.split(key)

    B = 8
    x = jax.random.normal(kx, (B, 10), jnp.float32)
    w1, b1, w2, b2 = init_params(kp)

    # Plain-JAX reference (same math as the PyTorch forward).
    ref = jnp.maximum(x @ w1 + b1, 0.0) @ w2 + b2

    # f32 path: numerically matches the PyTorch forward.
    out = jax.block_until_ready(simple_nn_forward(x, w1, b1, w2, b2))
    assert out.shape == (B, 2)
    assert jnp.allclose(out, ref, atol=1e-5, rtol=1e-5)

    # bf16-input path (recommended large-batch config; f32 accumulation on MXU).
    out_bf16 = jax.block_until_ready(
        simple_nn_forward(x, w1, b1, w2, b2, compute_dtype=jnp.bfloat16))
    assert out_bf16.shape == (B, 2)
    assert jnp.allclose(out_bf16, ref, atol=5e-2, rtol=5e-2)

    print("KERNEL_OK")
</pallas_src>

<mosaic_0001>
module attributes {stable_mosaic.version = 11 : i64} {
  func.func @simple_nn_kernel(%arg0: i32, %arg1: memref<128x10xf32, #tpu.memory_space<vmem>>, %arg2: memref<10x50xf32, #tpu.memory_space<vmem>>, %arg3: memref<1x50xf32, #tpu.memory_space<vmem>>, %arg4: memref<2x50xf32, #tpu.memory_space<vmem>>, %arg5: memref<2x1xf32, #tpu.memory_space<vmem>>, %arg6: memref<2x128xf32, #tpu.memory_space<vmem>>) attributes {dimension_semantics = [#tpu.dimension_semantics<parallel>], iteration_bounds = array<i64: 1>, scalar_prefetch = 0 : i64, scratch_operands = 0 : i64, tpu.core_type = #tpu.core_type<tc>, window_params = [{transform_indices = @transform_0, window_bounds = array<i64: 128, 10>}, {pipeline_mode = #tpu.pipeline_mode<synchronous>, transform_indices = @transform_1, window_bounds = array<i64: 10, 50>}, {pipeline_mode = #tpu.pipeline_mode<synchronous>, transform_indices = @transform_2, window_bounds = array<i64: 1, 50>}, {pipeline_mode = #tpu.pipeline_mode<synchronous>, transform_indices = @transform_3, window_bounds = array<i64: 2, 50>}, {pipeline_mode = #tpu.pipeline_mode<synchronous>, transform_indices = @transform_4, window_bounds = array<i64: 2, 1>}, {transform_indices = @transform_5, window_bounds = array<i64: 2, 128>}]} {
    %c0 = arith.constant 0 : index
    %c0_0 = arith.constant 0 : index
    %0 = vector.load %arg1[%c0, %c0_0] : memref<128x10xf32, #tpu.memory_space<vmem>>, vector<128x10xf32>
    %c0_1 = arith.constant 0 : index
    %c0_2 = arith.constant 0 : index
    %1 = vector.load %arg2[%c0_1, %c0_2] : memref<10x50xf32, #tpu.memory_space<vmem>>, vector<10x50xf32>
    %cst = arith.constant dense<0.000000e+00> : vector<128x50xf32>
    %2 = tpu.matmul %0, %1, %cst {dimension_numbers = #tpu.dot_dimension_numbers<[1], [0], [0], [1], [0, 0, 1, 1], [], []>} : vector<128x10xf32>, vector<10x50xf32>, vector<128x50xf32> -> vector<128x50xf32>
    %c0_3 = arith.constant 0 : index
    %c0_4 = arith.constant 0 : index
    %3 = vector.load %arg3[%c0_3, %c0_4] : memref<1x50xf32, #tpu.memory_space<vmem>>, vector<1x50xf32>
    %4 = vector.broadcast %3 : vector<1x50xf32> to vector<128x50xf32>
    %5 = arith.addf %2, %4 : vector<128x50xf32>
    %cst_5 = arith.constant 0.000000e+00 : f32
    %6 = vector.broadcast %cst_5 : f32 to vector<128x50xf32>
    %7 = arith.maximumf %5, %6 : vector<128x50xf32>
    %c0_6 = arith.constant 0 : index
    %c0_7 = arith.constant 0 : index
    %8 = vector.load %arg4[%c0_6, %c0_7] : memref<2x50xf32, #tpu.memory_space<vmem>>, vector<2x50xf32>
    %cst_8 = arith.constant dense<0.000000e+00> : vector<2x128xf32>
    %9 = tpu.matmul %8, %7, %cst_8 {dimension_numbers = #tpu.dot_dimension_numbers<[1], [1], [0], [0], [0, 0, 1, 0], [], []>} : vector<2x50xf32>, vector<128x50xf32>, vector<2x128xf32> -> vector<2x128xf32>
    %c0_9 = arith.constant 0 : index
    %c0_10 = arith.constant 0 : index
    %10 = vector.load %arg5[%c0_9, %c0_10] : memref<2x1xf32, #tpu.memory_space<vmem>>, vector<2x1xf32>
    %11 = vector.broadcast %10 : vector<2x1xf32> to vector<2x128xf32>
    %12 = arith.addf %9, %11 : vector<2x128xf32>
    %c0_11 = arith.constant 0 : index
    %c0_12 = arith.constant 0 : index
    %13 = vector.load %arg6[%c0_11, %c0_12] : memref<2x128xf32, #tpu.memory_space<vmem>>, vector<2x128xf32>
    tpu.vector_store %arg6[%c0_11, %c0_12], %12 {strides = array<i32>} : memref<2x128xf32, #tpu.memory_space<vmem>>, vector<2x128xf32>,
    return
  }
  func.func @transform_0(%arg0: i32) -> (i32, i32) {
    %c0_i32 = arith.constant 0 : i32
    %c0_i32_0 = arith.constant 0 : i32
    return %arg0, %c0_i32 : i32, i32
  }
  func.func @transform_1(%arg0: i32) -> (i32, i32) {
    %c0_i32 = arith.constant 0 : i32
    %c0_i32_0 = arith.constant 0 : i32
    %c0_i32_1 = arith.constant 0 : i32
    return %c0_i32, %c0_i32_0 : i32, i32
  }
  func.func @transform_2(%arg0: i32) -> (i32, i32) {
    %c0_i32 = arith.constant 0 : i32
    %c0_i32_0 = arith.constant 0 : i32
    %c0_i32_1 = arith.constant 0 : i32
    return %c0_i32, %c0_i32_0 : i32, i32
  }
  func.func @transform_3(%arg0: i32) -> (i32, i32) {
    %c0_i32 = arith.constant 0 : i32
    %c0_i32_0 = arith.constant 0 : i32
    %c0_i32_1 = arith.constant 0 : i32
    return %c0_i32, %c0_i32_0 : i32, i32
  }
  func.func @transform_4(%arg0: i32) -> (i32, i32) {
    %c0_i32 = arith.constant 0 : i32
    %c0_i32_0 = arith.constant 0 : i32
    %c0_i32_1 = arith.constant 0 : i32
    return %c0_i32, %c0_i32_0 : i32, i32
  }
  func.func @transform_5(%arg0: i32) -> (i32, i32) {
    %c0_i32 = arith.constant 0 : i32
    %c0_i32_0 = arith.constant 0 : i32
    return %c0_i32, %arg0 : i32, i32
  }
}

</mosaic_0001>

<llo_original>
// kernel: tpu_custom_call.1
$region0: #{tpu_custom_call.1}
  #allocation0 [shape = 'u32[]', space=smem, size = 0x4, offset = 0x4, fixed_abs, tag = 'smem constant byte address 0x4 - core index']
  #allocation1 [shape = 'u32[144,128]{1,0:T(1,128)}', space=vmem, size = 0x12000, scoped, tag = 'internal scratch']
  %s0 = inlined_call_operand.vmem [shape: f32[128,10], index: 0, kind: input, shape index: {}]
  %s1 = inlined_call_operand.vmem [shape: f32[10,50], index: 1, kind: input, shape index: {}]
  %s2 = inlined_call_operand.vmem [shape: f32[1,50], index: 2, kind: input, shape index: {}]
  %s3 = inlined_call_operand.vmem [shape: f32[2,50], index: 3, kind: input, shape index: {}]
  %s4 = inlined_call_operand.vmem [shape: f32[2,1], index: 4, kind: input, shape index: {}]
  %s5 = inlined_call_operand.hbm [shape: f32[2,128], index: 5, kind: output, shape index: {}]
  %s6 = sld [smem:[#allocation0]]
  $region30: #{tpu_custom_call.1} parent=0
    _
  %s8 = ssub.s32 1, %s6
  %s9 = scalar_select 0, %s8, %s6
  $region1: #{tpu_custom_call.1} parent=0
    #allocation2 [shape = 'u8[1024]{0}', space=vmem, size = 0x400, scoped, tag = 'output window, operand 0, single buffered']
    #allocation3 [shape = 's32[1]{0}', space=sflag, size = 0x4, scoped, tag = 'scoped memory for tpu_custom_call.1']
    %10 = vsyncpa [#allocation3], 0
    // Predicated region
    $region2: #{tpu_custom_call.1} parent=1 // pred_check
      _
    $region3: #{tpu_custom_call.1} parent=1 // pred_check_branch
      %12 = sbr.rel (0) target = $region5
    $region4: #{tpu_custom_call.1} parent=1 // pred_region
      _
    $region5: #{tpu_custom_call.1} parent=1 // pred_fallthru
      _
    // Predicated region
    $region6: #{tpu_custom_call.1} parent=1 // pred_check
      _
    $region7: #{tpu_custom_call.1} parent=1 // pred_check_branch
      %14 = sbr.rel (0) target = $region9
    $region8: #{tpu_custom_call.1} parent=1 // pred_region
      _
    $region9: #{tpu_custom_call.1} parent=1 // pred_fallthru
      _
    // Predicated region
    $region10: #{tpu_custom_call.1} parent=1 // pred_check
      _
    $region11: #{tpu_custom_call.1} parent=1 // pred_check_branch
      %16 = sbr.rel (0) target = $region13
    $region12: #{tpu_custom_call.1} parent=1 // pred_region
      _
    $region13: #{tpu_custom_call.1} parent=1 // pred_fallthru
      _
    // Predicated region
    $region14: #{tpu_custom_call.1} parent=1 // pred_check
      _
    $region15: #{tpu_custom_call.1} parent=1 // pred_check_branch
      %18 = sbr.rel (0) target = $region17
    $region16: #{tpu_custom_call.1} parent=1 // pred_region
      _
    $region17: #{tpu_custom_call.1} parent=1 // pred_fallthru
      _
    // Predicated region
    $region18: #{tpu_custom_call.1} parent=1 // pred_check
      _
    $region19: #{tpu_custom_call.1} parent=1 // pred_check_branch
      %20 = sbr.rel (0) target = $region21
    $region20: #{tpu_custom_call.1} parent=1 // pred_region
      _
    $region21: #{tpu_custom_call.1} parent=1 // pred_fallthru
      _
    %v21 = vld [vmem:[%s0] sm:$0xff]
    %v22 = vld [vmem:[%s0 + $0x8] sm:$0xff]
    %v23 = vld [vmem:[%s0 + $0x10] sm:$0xff]
    %v24 = vld [vmem:[%s0 + $0x18] sm:$0xff]
    %v25 = vld [vmem:[%s0 + $0x20] sm:$0xff]
    %v26 = vld [vmem:[%s0 + $0x28] sm:$0xff]
    %v27 = vld [vmem:[%s0 + $0x30] sm:$0xff]
    %v28 = vld [vmem:[%s0 + $0x38] sm:$0xff]
    %v29 = vld [vmem:[%s0 + $0x40] sm:$0xff]
    %v30 = vld [vmem:[%s0 + $0x48] sm:$0xff]
    %v31 = vld [vmem:[%s0 + $0x50] sm:$0xff]
    %v32 = vld [vmem:[%s0 + $0x58] sm:$0xff]
    %v33 = vld [vmem:[%s0 + $0x60] sm:$0xff]
    %v34 = vld [vmem:[%s0 + $0x68] sm:$0xff]
    %v35 = vld [vmem:[%s0 + $0x70] sm:$0xff]
    %v36 = vld [vmem:[%s0 + $0x78] sm:$0xff]
    %v37 = vld [vmem:[%s1] sm:$0xff]
    %v38 = vld [vmem:[%s1 + $0x8] sm:$0x3]
    %v39 = vld [vmem:[%s2] sm:$0x1]
    %v41 = vlaneseq
    %v42 = vshrl.u32 %v41, 7
    %v43 = vsub.s32 0, %v42
    %v44 = vrot.slane %v39, %v43
    %vm46 = vcmask 80896
    %v48 = vsel %vm46, %v21, 0
    %v51 = vsel %vm46, %v22, 0
    %v54 = vsel %vm46, %v23, 0
    %v57 = vsel %vm46, %v24, 0
    %v60 = vsel %vm46, %v25, 0
    %v63 = vsel %vm46, %v26, 0
    %v66 = vsel %vm46, %v27, 0
    %v69 = vsel %vm46, %v28, 0
    %v72 = vsel %vm46, %v29, 0
    %v75 = vsel %vm46, %v30, 0
    %v78 = vsel %vm46, %v31, 0
    %v81 = vsel %vm46, %v32, 0
    %v84 = vsel %vm46, %v33, 0
    %v87 = vsel %vm46, %v34, 0
    %v90 = vsel %vm46, %v35, 0
    %v93 = vsel %vm46, %v36, 0
    %vm95 = vcmask 1041408
    %v97 = vsel %vm95, %v38, 0
    %99 = vmatprep.subr.mxu0 0.0
    %100 = vmatpush1.msra.mxu0 0.0
    %101 = vmatprep.subr.mxu0 0.0
    %102 = vmatpush1.msra.mxu0 0.0
    %103 = vmatprep.subr.mxu0 0.0
    %104 = vmatpush1.msra.mxu0 0.0
    %105 = vmatprep.subr.mxu0 0.0
    %106 = vmatpush1.msra.mxu0 0.0
    %107 = vmatprep.subr.mxu0 0.0
    %108 = vmatpush1.msra.mxu0 0.0
    %109 = vmatprep.subr.mxu0 0.0
    %110 = vmatpush1.msra.mxu0 0.0
    %111 = vmatprep.subr.mxu0 0.0
    %112 = vmatpush1.msra.mxu0 0.0
    %113 = vmatprep.subr.mxu0 0.0
    %114 = vmatpush1.msra.mxu0 0.0
    %115 = vmatprep.subr.mxu0 0.0
    %116 = vmatpush1.msra.mxu0 0.0
    %117 = vmatprep.subr.mxu0 0.0
    %118 = vmatpush1.msra.mxu0 0.0
    %119 = vmatprep.subr.mxu0 0.0
    %120 = vmatpush1.msra.mxu0 0.0
    %121 = vmatprep.subr.mxu0 0.0
    %122 = vmatpush1.msra.mxu0 0.0
    %123 = vmatprep.subr.mxu0 0.0
    %124 = vmatpush1.msra.mxu0 0.0
    %125 = vmatprep.subr.mxu0 0.0
    %126 = vmatpush1.msra.mxu0 0.0
    %127 = vmatprep.subr.mxu0 0.0
    %128 = vmatpush1.msra.mxu0 %v97
    %129 = vmatprep.subr.mxu0 0.0
    %130 = vmatpush1.msra.mxu0 %v37
    %131 = vmatprep.subr.mxu0 0.0
    %132 = vmatpush2.msra.mxu0 0.0
    %133 = vmatprep.subr.mxu0 0.0
    %134 = vmatpush2.msra.mxu0 0.0
    %135 = vmatprep.subr.mxu0 0.0
    %136 = vmatpush2.msra.mxu0 0.0
    %137 = vmatprep.subr.mxu0 0.0
    %138 = vmatpush2.msra.mxu0 0.0
    %139 = vmatprep.subr.mxu0 0.0
    %140 = vmatpush2.msra.mxu0 0.0
    %141 = vmatprep.subr.mxu0 0.0
    %142 = vmatpush2.msra.mxu0 0.0
    %143 = vmatprep.subr.mxu0 0.0
    %144 = vmatpush2.msra.mxu0 0.0
    %145 = vmatprep.subr.mxu0 0.0
    %146 = vmatpush2.msra.mxu0 0.0
    %147 = vmatprep.subr.mxu0 0.0
    %148 = vmatpush2.msra.mxu0 0.0
    %149 = vmatprep.subr.mxu0 0.0
    %150 = vmatpush2.msra.mxu0 0.0
    %151 = vmatprep.subr.mxu0 0.0
    %152 = vmatpush2.msra.mxu0 0.0
    %153 = vmatprep.subr.mxu0 0.0
    %154 = vmatpush2.msra.mxu0 0.0
    %155 = vmatprep.subr.mxu0 0.0
    %156 = vmatpush2.msra.mxu0 0.0
    %157 = vmatprep.subr.mxu0 0.0
    %158 = vmatpush2.msra.mxu0 0.0
    %159 = vmatprep.subr.mxu0 0.0
    %160 = vmatpush2.msra.mxu0 0.0
    %161 = vmatprep.subr.mxu0 0.0
    %162 = vmatpush2.msra.mxu0 0.0
    %163 = vmatprep.mubr.f32.mxu0 0.0
    %164 = vmatmul.mubr.f32.gmra.mxu0 %v48
    %v165 = vpop.f32.mrf.mxu0
    %v166 = vadd.f32 %v44, %v165
    %v167 = vpop.f32.mrf.mxu0
    %168 = vmatprep.mubr.f32.mxu0 0.0
    %169 = vmatmul.mubr.f32.gmra.mxu0 %v51
    %v170 = vpop.f32.mrf.mxu0
    %v171 = vadd.f32 %v44, %v170
    %v172 = vpop.f32.mrf.mxu0
    %173 = vmatprep.mubr.f32.mxu0 0.0
    %174 = vmatmul.mubr.f32.gmra.mxu0 %v54
    %v175 = vpop.f32.mrf.mxu0
    %v176 = vadd.f32 %v44, %v175
    %v177 = vpop.f32.mrf.mxu0
    %178 = vmatprep.mubr.f32.mxu0 0.0
    %179 = vmatmul.mubr.f32.gmra.mxu0 %v57
    %v180 = vpop.f32.mrf.mxu0
    %v181 = vadd.f32 %v44, %v180
    %v182 = vpop.f32.mrf.mxu0
    %183 = vmatprep.mubr.f32.mxu0 0.0
    %184 = vmatmul.mubr.f32.gmra.mxu0 %v60
    %v185 = vpop.f32.mrf.mxu0
    %v186 = vadd.f32 %v44, %v185
    %v187 = vpop.f32.mrf.mxu0
    %188 = vmatprep.mubr.f32.mxu0 0.0
    %189 = vmatmul.mubr.f32.gmra.mxu0 %v63
    %v190 = vpop.f32.mrf.mxu0
    %v191 = vadd.f32 %v44, %v190
    %v192 = vpop.f32.mrf.mxu0
    %193 = vmatprep.mubr.f32.mxu0 0.0
    %194 = vmatmul.mubr.f32.gmra.mxu0 %v66
    %v195 = vpop.f32.mrf.mxu0
    %v196 = vadd.f32 %v44, %v195
    %v197 = vpop.f32.mrf.mxu0
    %198 = vmatprep.mubr.f32.mxu0 0.0
    %199 = vmatmul.mubr.f32.gmra.mxu0 %v69
    %v200 = vpop.f32.mrf.mxu0
    %v201 = vadd.f32 %v44, %v200
    %v202 = vpop.f32.mrf.mxu0
    %203 = vmatprep.mubr.f32.mxu0 0.0
    %204 = vmatmul.mubr.f32.gmra.mxu0 %v72
    %v205 = vpop.f32.mrf.mxu0
    %v206 = vadd.f32 %v44, %v205
    %v207 = vpop.f32.mrf.mxu0
    %208 = vmatprep.mubr.f32.mxu0 0.0
    %209 = vmatmul.mubr.f32.gmra.mxu0 %v75
    %v210 = vpop.f32.mrf.mxu0
    %v211 = vadd.f32 %v44, %v210
    %v212 = vpop.f32.mrf.mxu0
    %213 = vmatprep.mubr.f32.mxu0 0.0
    %214 = vmatmul.mubr.f32.gmra.mxu0 %v78
    %v215 = vpop.f32.mrf.mxu0
    %v216 = vadd.f32 %v44, %v215
    %v217 = vpop.f32.mrf.mxu0
    %218 = vmatprep.mubr.f32.mxu0 0.0
    %219 = vmatmul.mubr.f32.gmra.mxu0 %v81
    %v220 = vpop.f32.mrf.mxu0
    %v221 = vadd.f32 %v44, %v220
    %v222 = vpop.f32.mrf.mxu0
    %223 = vmatprep.mubr.f32.mxu0 0.0
    %224 = vmatmul.mubr.f32.gmra.mxu0 %v84
    %v225 = vpop.f32.mrf.mxu0
    %v226 = vadd.f32 %v44, %v225
    %v227 = vpop.f32.mrf.mxu0
    %228 = vmatprep.mubr.f32.mxu0 0.0
    %229 = vmatmul.mubr.f32.gmra.mxu0 %v87
    %v230 = vpop.f32.mrf.mxu0
    %v231 = vadd.f32 %v44, %v230
    %v232 = vpop.f32.mrf.mxu0
    %233 = vmatprep.mubr.f32.mxu0 0.0
    %234 = vmatmul.mubr.f32.gmra.mxu0 %v90
    %v235 = vpop.f32.mrf.mxu0
    %v236 = vadd.f32 %v44, %v235
    %v237 = vpop.f32.mrf.mxu0
    %238 = vmatprep.mubr.f32.mxu0 0.0
    %239 = vmatmul.mubr.f32.gmra.mxu0 %v93
    %v240 = vpop.f32.mrf.mxu0
    %v241 = vadd.f32 %v44, %v240
    %v242 = vpop.f32.mrf.mxu0
    %243 = vdwg.mxu0
    %v244 = vmax.f32 %v166, 0.0
    %v245 = vmax.f32 %v171, 0.0
    %v246 = vmax.f32 %v176, 0.0
    %v247 = vmax.f32 %v181, 0.0
    %v248 = vmax.f32 %v186, 0.0
    %v249 = vmax.f32 %v191, 0.0
    %v250 = vmax.f32 %v196, 0.0
    %v251 = vmax.f32 %v201, 0.0
    %v252 = vmax.f32 %v206, 0.0
    %v253 = vmax.f32 %v211, 0.0
    %v254 = vmax.f32 %v216, 0.0
    %v255 = vmax.f32 %v221, 0.0
    %v256 = vmax.f32 %v226, 0.0
    %v257 = vmax.f32 %v231, 0.0
    %v258 = vmax.f32 %v236, 0.0
    %v259 = vmax.f32 %v241, 0.0
    %v260 = vld [vmem:[%s3] sm:$0x3]
    %v261 = vld [vmem:[%s4] sm:$0x3]
    %263 = vset.pattern.permute.xlu0 0
    %264 = vperm.xlu0 %263, %v261
    %v265 = vpop.permute.xlu0 %264
    %vm267 = vcmask 408576
    %v269 = vsel %vm267, %v260, 0
    %v272 = vsel %vm267, %v244, 0
    %v275 = vsel %vm267, %v245, 0
    %v278 = vsel %vm267, %v246, 0
    %v281 = vsel %vm267, %v247, 0
    %v284 = vsel %vm267, %v248, 0
    %v287 = vsel %vm267, %v249, 0
    %v290 = vsel %vm267, %v250, 0
    %v293 = vsel %vm267, %v251, 0
    %v296 = vsel %vm267, %v252, 0
    %v299 = vsel %vm267, %v253, 0
    %v302 = vsel %vm267, %v254, 0
    %v305 = vsel %vm267, %v255, 0
    %v308 = vsel %vm267, %v256, 0
    %v311 = vsel %vm267, %v257, 0
    %v314 = vsel %vm267, %v258, 0
    %v317 = vsel %vm267, %v259, 0
    %319 = vmatprep.subr.mxu0 0.0
    %320 = vmatpush1.xpose.msra.mxu0 %v317
    %321 = vmatprep.subr.mxu0 0.0
    %322 = vmatpush1.xpose.msra.mxu0 %v314
    %323 = vmatprep.subr.mxu0 0.0
    %324 = vmatpush1.xpose.msra.mxu0 %v311
    %325 = vmatprep.subr.mxu0 0.0
    %326 = vmatpush1.xpose.msra.mxu0 %v308
    %327 = vmatprep.subr.mxu0 0.0
    %328 = vmatpush1.xpose.msra.mxu0 %v305
    %329 = vmatprep.subr.mxu0 0.0
    %330 = vmatpush1.xpose.msra.mxu0 %v302
    %331 = vmatprep.subr.mxu0 0.0
    %332 = vmatpush1.xpose.msra.mxu0 %v299
    %333 = vmatprep.subr.mxu0 0.0
    %334 = vmatpush1.xpose.msra.mxu0 %v296
    %335 = vmatprep.subr.mxu0 0.0
    %336 = vmatpush1.xpose.msra.mxu0 %v293
    %337 = vmatprep.subr.mxu0 0.0
    %338 = vmatpush1.xpose.msra.mxu0 %v290
    %339 = vmatprep.subr.mxu0 0.0
    %340 = vmatpush1.xpose.msra.mxu0 %v287
    %341 = vmatprep.subr.mxu0 0.0
    %342 = vmatpush1.xpose.msra.mxu0 %v284
    %343 = vmatprep.subr.mxu0 0.0
    %344 = vmatpush1.xpose.msra.mxu0 %v281
    %345 = vmatprep.subr.mxu0 0.0
    %346 = vmatpush1.xpose.msra.mxu0 %v278
    %347 = vmatprep.subr.mxu0 0.0
    %348 = vmatpush1.xpose.msra.mxu0 %v275
    %349 = vmatprep.subr.mxu0 0.0
    %350 = vmatpush1.xpose.msra.mxu0 %v272
    %351 = vmatprep.subr.mxu0 0.0
    %352 = vmatpush2.xpose.msra.mxu0 0.0
    %353 = vmatprep.subr.mxu0 0.0
    %354 = vmatpush2.xpose.msra.mxu0 0.0
    %355 = vmatprep.subr.mxu0 0.0
    %356 = vmatpush2.xpose.msra.mxu0 0.0
    %357 = vmatprep.subr.mxu0 0.0
    %358 = vmatpush2.xpose.msra.mxu0 0.0
    %359 = vmatprep.subr.mxu0 0.0
    %360 = vmatpush2.xpose.msra.mxu0 0.0
    %361 = vmatprep.subr.mxu0 0.0
    %362 = vmatpush2.xpose.msra.mxu0 0.0
    %363 = vmatprep.subr.mxu0 0.0
    %364 = vmatpush2.xpose.msra.mxu0 0.0
    %365 = vmatprep.subr.mxu0 0.0
    %366 = vmatpush2.xpose.msra.mxu0 0.0
    %367 = vmatprep.subr.mxu0 0.0
    %368 = vmatpush2.xpose.msra.mxu0 0.0
    %369 = vmatprep.subr.mxu0 0.0
    %370 = vmatpush2.xpose.msra.mxu0 0.0
    %371 = vmatprep.subr.mxu0 0.0
    %372 = vmatpush2.xpose.msra.mxu0 0.0
    %373 = vmatprep.subr.mxu0 0.0
    %374 = vmatpush2.xpose.msra.mxu0 0.0
    %375 = vmatprep.subr.mxu0 0.0
    %376 = vmatpush2.xpose.msra.mxu0 0.0
    %377 = vmatprep.subr.mxu0 0.0
    %378 = vmatpush2.xpose.msra.mxu0 0.0
    %379 = vmatprep.subr.mxu0 0.0
    %380 = vmatpush2.xpose.msra.mxu0 0.0
    %381 = vmatprep.subr.mxu0 0.0
    %382 = vmatpush2.xpose.msra.mxu0 0.0
    %383 = vmatprep.mubr.f32.mxu0 0.0
    %384 = vmatmul.mubr.f32.gmra.mxu0 %v269
    %v385 = vpop.f32.mrf.mxu0
    %v386 = vadd.f32 %v265, %v385
    %v387 = vpop.f32.mrf.mxu0
    %388 = vdwg.mxu0
    %389 = vst [vmem:[#allocation2] sm:$0x3] %v386
    // Predicated region
    $region22: #{tpu_custom_call.1} parent=1 // pred_check
      _
    $region23: #{tpu_custom_call.1} parent=1 // pred_check_branch
      %391 = sbr.rel (0) target = $region25
    $region24: #{tpu_custom_call.1} parent=1 // pred_region
      %s393 = ssub.s32 32, 32
      %394 = vsyncadd [#allocation3], %s393
      %s396 = sshll.u32 [#allocation2], 4
      %s397 = int_to_ptr.vmem [resolvable:$true] %s396
      %399 = dma.vmem_to_hbm [thread:$0]  %s397, 32, %s5, [#allocation3]
    $region25: #{tpu_custom_call.1} parent=1 // pred_fallthru
      _
    // Predicated region
    $region26: #{tpu_custom_call.1} parent=1 // pred_check
      _
    $region27: #{tpu_custom_call.1} parent=1 // pred_check_branch
      %401 = sbr.rel (0) target = $region29
    $region28: #{tpu_custom_call.1} parent=1 // pred_region
      %402 = dma.done [#allocation3], 32
    $region29: #{tpu_custom_call.1} parent=1 // pred_fallthru
      _
    %403 = vsyncpa [#allocation3], 1

</llo_original>
